<compile_context>
chip_gen: v7x
topology: tpu7x:2x2x1
jax: 0.10.0
libtpu: 0.0.40
codegen_flags: <defaults>
</compile_context>

<pallas_src>
import jax
import jax.numpy as jnp
from jax.experimental import pallas as pl
from jax.experimental.pallas import tpu as pltpu


def celoss_kernel(pred_ref, tgt_ref, out_ref):
    # pred_ref, tgt_ref: (1, C, TS, 128) blocks; out_ref: (1, TS, 128)
    C = pred_ref.shape[1]

    # Channel 0 seeds the running reductions.
    s = jax.nn.sigmoid(pred_ref[0, 0].astype(jnp.float32))   # (TS, 128)
    best_t = tgt_ref[0, 0]                                    # running target max
    best_s = s                                                # sigmoid at argmax
    sum_exp = jnp.exp(s)                                      # running sum of exp

    # Statically unrolled running max over the (small) channel axis.
    # Strictly-greater comparison preserves torch.argmax first-occurrence
    # tie-break.  Pure VPU selects on full (TS,128) slices: no iota, no
    # one-hot, no cross-sublane reduce.
    for c in range(1, C):
        sc = jax.nn.sigmoid(pred_ref[0, c].astype(jnp.float32))
        tc = tgt_ref[0, c]
        gt = tc > best_t
        best_t = jnp.where(gt, tc, best_t)
        best_s = jnp.where(gt, sc, best_s)
        sum_exp = sum_exp + jnp.exp(sc)

    # Unshifted logsumexp is safe: s = sigmoid(.) in (0,1) so exp(s) in (1,e).
    out_ref[0] = jnp.log(sum_exp) - best_s


def _round8(x):
    return max(8, ((x + 7) // 8) * 8)


def _choose_tile_rows(rows_raw, n_batch, C, pred_bytes, tgt_bytes, vmem_cap):
    """Pick the sublane-row tile TS (multiple of 8)."""
    rows8 = _round8(rows_raw)

    def footprint(t):
        # double-buffered pipeline footprint: 2 inputs + f32 output
        return 2 * C * t * 128 * (pred_bytes + tgt_bytes) + 2 * t * 128 * 4

    # ~128K lanes per step (each input block ~C * 0.5 MiB for f32) amortizes
    # the ~0.35 us/step grid overhead to well under 10%.
    t = min(rows8, 1024)

    # Keep the double-buffered footprint under ~half the VMEM budget so the
    # compiler has headroom for its elementwise temporaries (best_*/sum_exp).
    while t > 8 and 2 * footprint(t) > vmem_cap:
        t = _round8(t // 2)

    # Keep >= 4 total grid steps so megacore sharding has work on both v7x
    # TensorCores (no effect on single-TC v5e/v6e).
    while t > 8 and n_batch * (-(-rows_raw // t)) < 4:
        t = _round8(t // 2)

    return t


def celoss_forward(pred, target):
    """pred, target: (N, C, H, W). Returns (N, H, W) float32 per-pixel CE."""
    N, C, H, W = pred.shape
    HW = H * W

    # Per-generation VMEM budget (v7x only has 64 MiB per TC).
    try:
        phys_vmem = pltpu.get_tpu_info().vmem_capacity_bytes
    except Exception:
        phys_vmem = 128 * 1024 * 1024
    vmem_cap = min(64 * 1024 * 1024, int(phys_vmem * 3 // 4))

    rows_raw = pl.cdiv(HW, 128)
    ts = _choose_tile_rows(rows_raw, N, C,
                           pred.dtype.itemsize, target.dtype.itemsize, vmem_cap)
    n_tiles = pl.cdiv(rows_raw, ts)
    rows_pad = n_tiles * ts
    HW_pad = rows_pad * 128

    pred2 = pred.reshape(N, C, HW)
    tgt2 = target.reshape(N, C, HW)
    if HW_pad != HW:
        pad = ((0, 0), (0, 0), (0, HW_pad - HW))
        pred2 = jnp.pad(pred2, pad)
        tgt2 = jnp.pad(tgt2, pad)
    # Spatial axis on (sublane, lane): (N, C, rows_pad, 128)
    pred4 = pred2.reshape(N, C, rows_pad, 128)
    tgt4 = tgt2.reshape(N, C, rows_pad, 128)

    out = pl.pallas_call(
        celoss_kernel,
        out_shape=jax.ShapeDtypeStruct((N, rows_pad, 128), jnp.float32),
        grid_spec=pl.GridSpec(
            grid=(N, n_tiles),
            in_specs=[
                pl.BlockSpec((1, C, ts, 128), lambda n, h: (n, 0, h, 0)),
                pl.BlockSpec((1, C, ts, 128), lambda n, h: (n, 0, h, 0)),
            ],
            out_specs=pl.BlockSpec((1, ts, 128), lambda n, h: (n, h, 0)),
        ),
        compiler_params=pltpu.CompilerParams(
            dimension_semantics=("parallel", "parallel"),
            vmem_limit_bytes=vmem_cap,
        ),
    )(pred4, tgt4)

    return out.reshape(N, HW_pad)[:, :HW].reshape(N, H, W)


def celoss_reference(pred, target):
    """Pure-JAX reference matching the PyTorch module."""
    s = jax.nn.sigmoid(pred.astype(jnp.float32))                 # (N,C,H,W)
    cls = jnp.argmax(target, axis=1)                             # (N,H,W)
    lse = jax.nn.logsumexp(s, axis=1)                            # (N,H,W)
    s_sel = jnp.take_along_axis(s, cls[:, None], axis=1)[:, 0]   # (N,H,W)
    return lse - s_sel


if __name__ == "__main__":
    key = jax.random.PRNGKey(0)

    # Small shape consistent with the module.
    k1, k2 = jax.random.split(key)
    N, C, H, W = 2, 4, 16, 16
    pred = jax.random.normal(k1, (N, C, H, W), dtype=jnp.float32)
    target = jax.random.normal(k2, (N, C, H, W), dtype=jnp.float32)

    out = jax.block_until_ready(celoss_forward(pred, target))
    ref = celoss_reference(pred, target)
    assert out.shape == (N, H, W)
    assert jnp.allclose(out, ref, atol=1e-5, rtol=1e-5)

    # Larger spatial extent to exercise the multi-block / megacore path.
    k3, k4 = jax.random.split(k2)
    N2, C2, H2, W2 = 2, 4, 256, 256          # HW = 65536 -> 512 sublane rows
    pred2 = jax.random.normal(k3, (N2, C2, H2, W2), dtype=jnp.float32)
    target2 = jax.random.normal(k4, (N2, C2, H2, W2), dtype=jnp.float32)

    out2 = jax.block_until_ready(celoss_forward(pred2, target2))
    ref2 = celoss_reference(pred2, target2)
    assert out2.shape == (N2, H2, W2)
    assert jnp.allclose(out2, ref2, atol=1e-5, rtol=1e-5)

    # Non-128-divisible spatial shape to exercise the padding path.
    k5, k6 = jax.random.split(k4)
    N3, C3, H3, W3 = 2, 4, 17, 19
    pred3 = jax.random.normal(k5, (N3, C3, H3, W3), dtype=jnp.float32)
    target3 = jax.random.normal(k6, (N3, C3, H3, W3), dtype=jnp.float32)

    out3 = jax.block_until_ready(celoss_forward(pred3, target3))
    ref3 = celoss_reference(pred3, target3)
    assert out3.shape == (N3, H3, W3)
    assert jnp.allclose(out3, ref3, atol=1e-5, rtol=1e-5)

    print("KERNEL_OK")
</pallas_src>

<mosaic_0001>
module attributes {stable_mosaic.version = 11 : i64} {
  func.func @celoss_kernel(%arg0: i32, %arg1: i32, %arg2: memref<1x4x8x128xf32, #tpu.memory_space<vmem>>, %arg3: memref<1x4x8x128xf32, #tpu.memory_space<vmem>>, %arg4: memref<1x8x128xf32, #tpu.memory_space<vmem>>) attributes {dimension_semantics = [#tpu.dimension_semantics<parallel>, #tpu.dimension_semantics<parallel>], iteration_bounds = array<i64: 2, 1>, scalar_prefetch = 0 : i64, scratch_operands = 0 : i64, tpu.core_type = #tpu.core_type<tc>, window_params = [{transform_indices = @transform_0, window_bounds = array<i64: 1, 4, 8, 128>}, {transform_indices = @transform_1, window_bounds = array<i64: 1, 4, 8, 128>}, {transform_indices = @transform_2, window_bounds = array<i64: 1, 8, 128>}]} {
    %c0 = arith.constant 0 : index
    %c0_0 = arith.constant 0 : index
    %c0_1 = arith.constant 0 : index
    %c0_2 = arith.constant 0 : index
    %0 = vector.load %arg2[%c0, %c0_0, %c0_1, %c0_2] : memref<1x4x8x128xf32, #tpu.memory_space<vmem>>, vector<1x1x8x128xf32>
    %1 = vector.shape_cast %0 : vector<1x1x8x128xf32> to vector<8x128xf32>
    %2 = arith.negf %1 : vector<8x128xf32>
    %3 = math.exp %2 : vector<8x128xf32>
    %cst = arith.constant 1.000000e+00 : f32
    %4 = vector.broadcast %cst : f32 to vector<8x128xf32>
    %5 = arith.addf %4, %3 : vector<8x128xf32>
    %6 = arith.divf %4, %5 : vector<8x128xf32>
    %c0_3 = arith.constant 0 : index
    %c0_4 = arith.constant 0 : index
    %c0_5 = arith.constant 0 : index
    %c0_6 = arith.constant 0 : index
    %7 = vector.load %arg3[%c0_3, %c0_4, %c0_5, %c0_6] : memref<1x4x8x128xf32, #tpu.memory_space<vmem>>, vector<1x1x8x128xf32>
    %8 = vector.shape_cast %7 : vector<1x1x8x128xf32> to vector<8x128xf32>
    %9 = math.exp %6 : vector<8x128xf32>
    %c0_7 = arith.constant 0 : index
    %c1 = arith.constant 1 : index
    %c0_8 = arith.constant 0 : index
    %c0_9 = arith.constant 0 : index
    %10 = vector.load %arg2[%c0_7, %c1, %c0_8, %c0_9] : memref<1x4x8x128xf32, #tpu.memory_space<vmem>>, vector<1x1x8x128xf32>
    %11 = vector.shape_cast %10 : vector<1x1x8x128xf32> to vector<8x128xf32>
    %12 = arith.negf %11 : vector<8x128xf32>
    %13 = math.exp %12 : vector<8x128xf32>
    %cst_10 = arith.constant 1.000000e+00 : f32
    %14 = vector.broadcast %cst_10 : f32 to vector<8x128xf32>
    %15 = arith.addf %14, %13 : vector<8x128xf32>
    %16 = arith.divf %14, %15 : vector<8x128xf32>
    %c0_11 = arith.constant 0 : index
    %c1_12 = arith.constant 1 : index
    %c0_13 = arith.constant 0 : index
    %c0_14 = arith.constant 0 : index
    %17 = vector.load %arg3[%c0_11, %c1_12, %c0_13, %c0_14] : memref<1x4x8x128xf32, #tpu.memory_space<vmem>>, vector<1x1x8x128xf32>
    %18 = vector.shape_cast %17 : vector<1x1x8x128xf32> to vector<8x128xf32>
    %19 = arith.cmpf ogt, %18, %8 : vector<8x128xf32>
    %20 = arith.select %19, %18, %8 : vector<8x128xi1>, vector<8x128xf32>
    %21 = arith.select %19, %16, %6 : vector<8x128xi1>, vector<8x128xf32>
    %22 = math.exp %16 : vector<8x128xf32>
    %23 = arith.addf %9, %22 : vector<8x128xf32>
    %c0_15 = arith.constant 0 : index
    %c2 = arith.constant 2 : index
    %c0_16 = arith.constant 0 : index
    %c0_17 = arith.constant 0 : index
    %24 = vector.load %arg2[%c0_15, %c2, %c0_16, %c0_17] : memref<1x4x8x128xf32, #tpu.memory_space<vmem>>, vector<1x1x8x128xf32>
    %25 = vector.shape_cast %24 : vector<1x1x8x128xf32> to vector<8x128xf32>
    %26 = arith.negf %25 : vector<8x128xf32>
    %27 = math.exp %26 : vector<8x128xf32>
    %cst_18 = arith.constant 1.000000e+00 : f32
    %28 = vector.broadcast %cst_18 : f32 to vector<8x128xf32>
    %29 = arith.addf %28, %27 : vector<8x128xf32>
    %30 = arith.divf %28, %29 : vector<8x128xf32>
    %c0_19 = arith.constant 0 : index
    %c2_20 = arith.constant 2 : index
    %c0_21 = arith.constant 0 : index
    %c0_22 = arith.constant 0 : index
    %31 = vector.load %arg3[%c0_19, %c2_20, %c0_21, %c0_22] : memref<1x4x8x128xf32, #tpu.memory_space<vmem>>, vector<1x1x8x128xf32>
    %32 = vector.shape_cast %31 : vector<1x1x8x128xf32> to vector<8x128xf32>
    %33 = arith.cmpf ogt, %32, %20 : vector<8x128xf32>
    %34 = arith.select %33, %32, %20 : vector<8x128xi1>, vector<8x128xf32>
    %35 = arith.select %33, %30, %21 : vector<8x128xi1>, vector<8x128xf32>
    %36 = math.exp %30 : vector<8x128xf32>
    %37 = arith.addf %23, %36 : vector<8x128xf32>
    %c0_23 = arith.constant 0 : index
    %c3 = arith.constant 3 : index
    %c0_24 = arith.constant 0 : index
    %c0_25 = arith.constant 0 : index
    %38 = vector.load %arg2[%c0_23, %c3, %c0_24, %c0_25] : memref<1x4x8x128xf32, #tpu.memory_space<vmem>>, vector<1x1x8x128xf32>
    %39 = vector.shape_cast %38 : vector<1x1x8x128xf32> to vector<8x128xf32>
    %40 = arith.negf %39 : vector<8x128xf32>
    %41 = math.exp %40 : vector<8x128xf32>
    %cst_26 = arith.constant 1.000000e+00 : f32
    %42 = vector.broadcast %cst_26 : f32 to vector<8x128xf32>
    %43 = arith.addf %42, %41 : vector<8x128xf32>
    %44 = arith.divf %42, %43 : vector<8x128xf32>
    %c0_27 = arith.constant 0 : index
    %c3_28 = arith.constant 3 : index
    %c0_29 = arith.constant 0 : index
    %c0_30 = arith.constant 0 : index
    %45 = vector.load %arg3[%c0_27, %c3_28, %c0_29, %c0_30] : memref<1x4x8x128xf32, #tpu.memory_space<vmem>>, vector<1x1x8x128xf32>
    %46 = vector.shape_cast %45 : vector<1x1x8x128xf32> to vector<8x128xf32>
    %47 = arith.cmpf ogt, %46, %34 : vector<8x128xf32>
    %48 = arith.select %47, %44, %35 : vector<8x128xi1>, vector<8x128xf32>
    %49 = math.exp %44 : vector<8x128xf32>
    %50 = arith.addf %37, %49 : vector<8x128xf32>
    %51 = math.log %50 : vector<8x128xf32>
    %52 = arith.subf %51, %48 : vector<8x128xf32>
    %c0_31 = arith.constant 0 : index
    %c0_32 = arith.constant 0 : index
    %c0_33 = arith.constant 0 : index
    %53 = vector.load %arg4[%c0_31, %c0_32, %c0_33] : memref<1x8x128xf32, #tpu.memory_space<vmem>>, vector<1x8x128xf32>
    %54 = vector.shape_cast %53 : vector<1x8x128xf32> to vector<8x128xf32>
    %55 = vector.shape_cast %52 : vector<8x128xf32> to vector<1x8x128xf32>
    tpu.vector_store %arg4[%c0_31, %c0_32, %c0_33], %55 {strides = array<i32>} : memref<1x8x128xf32, #tpu.memory_space<vmem>>, vector<1x8x128xf32>,
    return
  }
  func.func @transform_0(%arg0: i32, %arg1: i32) -> (i32, i32, i32, i32) {
    %c0_i32 = arith.constant 0 : i32
    %c0_i32_0 = arith.constant 0 : i32
    %c0_i32_1 = arith.constant 0 : i32
    return %arg0, %c0_i32, %arg1, %c0_i32_0 : i32, i32, i32, i32
  }
  func.func @transform_1(%arg0: i32, %arg1: i32) -> (i32, i32, i32, i32) {
    %c0_i32 = arith.constant 0 : i32
    %c0_i32_0 = arith.constant 0 : i32
    %c0_i32_1 = arith.constant 0 : i32
    return %arg0, %c0_i32, %arg1, %c0_i32_0 : i32, i32, i32, i32
  }
  func.func @transform_2(%arg0: i32, %arg1: i32) -> (i32, i32, i32) {
    %c0_i32 = arith.constant 0 : i32
    %c0_i32_0 = arith.constant 0 : i32
    return %arg0, %arg1, %c0_i32 : i32, i32, i32
  }
}

</mosaic_0001>

<llo_original>
// kernel: tpu_custom_call.1
$region0: #{tpu_custom_call.1}
  #allocation0 [shape = 'u32[]', space=smem, size = 0x4, offset = 0x4, fixed_abs, tag = 'smem constant byte address 0x4 - core index']
  #allocation1 [shape = 'u32[144,128]{1,0:T(1,128)}', space=vmem, size = 0x12000, scoped, tag = 'internal scratch']
  %s0 = inlined_call_operand.hbm [shape: f32[2,4,8,128], index: 0, kind: input, shape index: {}]
  %s1 = inlined_call_operand.hbm [shape: f32[2,4,8,128], index: 1, kind: input, shape index: {}]
  %s2 = inlined_call_operand.hbm [shape: f32[2,8,128], index: 2, kind: output, shape index: {}]
  %s3 = sld [smem:[#allocation0]]
  $region49: #{tpu_custom_call.1} parent=0
    _
  %s5 = ssub.s32 1, %s3
  %s6 = scalar_select 0, %s5, %s3
  $region1: #{tpu_custom_call.1} parent=0
    #allocation2 [shape = 'u8[32768]{0}', space=vmem, size = 0x8000, scoped, tag = 'input window, operand 0']
    #allocation3 [shape = 's32[2]{0}', space=sflag, size = 0x8, scoped, tag = 'scoped memory for tpu_custom_call.1']
    #allocation4 [shape = 's32[2]{0}', space=sflag, size = 0x8, scoped, tag = 'scoped memory for tpu_custom_call.1']
    #allocation5 [shape = 'u8[32768]{0}', space=vmem, size = 0x8000, scoped, tag = 'input window, operand 1']
    #allocation6 [shape = 's32[2]{0}', space=sflag, size = 0x8, scoped, tag = 'scoped memory for tpu_custom_call.1']
    #allocation7 [shape = 'u8[8192]{0}', space=vmem, size = 0x2000, scoped, tag = 'output window, operand 0']
    %7 = vsyncpa [#allocation3], 0
    %s8 = scalar_lea.sflag [#allocation3], 1
    %9 = vsyncpa %s8, 0
    %10 = vsyncpa [#allocation6], 0
    %s11 = scalar_lea.sflag [#allocation6], 1
    %12 = vsyncpa %s11, 0
    %13 = vsyncpa [#allocation4], 0
    %s14 = scalar_lea.sflag [#allocation4], 1
    %15 = vsyncpa %s14, 0
    loop: start=0, step=1, limit=4
    $region2: #{tpu_custom_call.1} parent=1 // loop_pre_header
      _
    $region3: #{tpu_custom_call.1} parent=1 // loop_header
      %s17 = sphi 0, %s21
      %p18 = scmp.ge.s32.totalorder %s17, 4
      %s24 = sphi 0, %s36
      %s25 = sphi 0, %s32
      %s26 = sphi 0, %s24
      %s27 = sphi 0, %s25
      %s28 = sphi 0, %s26
      %s29 = sphi 0, %s27
      %s41 = sphi 0, %s43
      %s44 = sphi 0, %s41
      %s45 = sphi 0, %s44
      %s61 = sphi 0, %s45
      %s69 = sphi 0, %s71
      %s72 = sphi 0, %s69
      %s73 = sphi 0, %s72
      %s89 = sphi 0, %s73
      %s97 = sphi 0, %s99
      %s100 = sphi 0, %s97
      %s101 = sphi 0, %s100
      %s117 = sphi 0, %s101
    $region4: #{tpu_custom_call.1} parent=1 // loop_header_branch
      %20 = sbr.rel (%p18) target = $region8
    $region5: #{tpu_custom_call.1} parent=1 // loop_body
      %s22 = ssub.s32 %s17, 1
      %s23 = ssub.s32 %s17, 2
      %s30 = sadd.s32 1, %s25
      %p31 = scmp.ge.s32.totalorder %s30, 1
      %s32 = scalar_select %p31, 0, %s30
      %s33 = sadd.s32 1, %s24
      %s34 = scalar_select %p31, %s33, %s24
      %p35 = scmp.ge.s32.totalorder %s34, 2
      %s36 = scalar_select %p35, 0, %s34
      %s37 = ssub.s32 %s24, %s36
      %s38 = ssub.s32 %s25, %s32
      %s39 = sor.u32 %s37, %s38
      %p40 = scmp.eq.s32.totalorder %s39, 0
      %s42 = sadd.s32 %s41, 1
      %s43 = scalar_select %p40, %s41, %s42
      %p46 = pneg %p40
      %p47 = scmp.eq.s32.totalorder %s17, 1
      %p48 = por %p46, %p47
      %p49 = scmp.ne.s32.totalorder %s41, %s44
      %p50 = scmp.eq.s32.totalorder %s17, 0
      %p51 = por %p49, %p50
      %p52 = scmp.ne.s32.totalorder %s41, %s44
      %p53 = scmp.eq.s32.totalorder %s22, 1
      %p54 = por %p52, %p53
      %p55 = scmp.ne.s32.totalorder %s44, %s45
      %p56 = scmp.eq.s32.totalorder %s22, 0
      %p57 = por %p55, %p56
      %p58 = scmp.ne.s32.totalorder %s44, %s45
      %p59 = scmp.eq.s32.totalorder %s23, 1
      %p60 = por %p58, %p59
      %p62 = scmp.ne.s32.totalorder %s45, %s61
      %p63 = scmp.eq.s32.totalorder %s23, 0
      %p64 = por %p62, %p63
      %s65 = ssub.s32 %s24, %s36
      %s66 = ssub.s32 %s25, %s32
      %s67 = sor.u32 %s65, %s66
      %p68 = scmp.eq.s32.totalorder %s67, 0
      %s70 = sadd.s32 %s69, 1
      %s71 = scalar_select %p68, %s69, %s70
      %p74 = pneg %p68
      %p75 = scmp.eq.s32.totalorder %s17, 1
      %p76 = por %p74, %p75
      %p77 = scmp.ne.s32.totalorder %s69, %s72
      %p78 = scmp.eq.s32.totalorder %s17, 0
      %p79 = por %p77, %p78
      %p80 = scmp.ne.s32.totalorder %s69, %s72
      %p81 = scmp.eq.s32.totalorder %s22, 1
      %p82 = por %p80, %p81
      %p83 = scmp.ne.s32.totalorder %s72, %s73
      %p84 = scmp.eq.s32.totalorder %s22, 0
      %p85 = por %p83, %p84
      %p86 = scmp.ne.s32.totalorder %s72, %s73
      %p87 = scmp.eq.s32.totalorder %s23, 1
      %p88 = por %p86, %p87
      %p90 = scmp.ne.s32.totalorder %s73, %s89
      %p91 = scmp.eq.s32.totalorder %s23, 0
      %p92 = por %p90, %p91
      %s93 = ssub.s32 %s24, %s36
      %s94 = ssub.s32 %s25, %s32
      %s95 = sor.u32 %s93, %s94
      %p96 = scmp.eq.s32.totalorder %s95, 0
      %s98 = sadd.s32 %s97, 1
      %s99 = scalar_select %p96, %s97, %s98
      %p102 = pneg %p96
      %p103 = scmp.eq.s32.totalorder %s17, 1
      %p104 = por %p102, %p103
      %p105 = scmp.ne.s32.totalorder %s97, %s100
      %p106 = scmp.eq.s32.totalorder %s17, 0
      %p107 = por %p105, %p106
      %p108 = scmp.ne.s32.totalorder %s97, %s100
      %p109 = scmp.eq.s32.totalorder %s22, 1
      %p110 = por %p108, %p109
      %p111 = scmp.ne.s32.totalorder %s100, %s101
      %p112 = scmp.eq.s32.totalorder %s22, 0
      %p113 = por %p111, %p112
      %p114 = scmp.ne.s32.totalorder %s100, %s101
      %p115 = scmp.eq.s32.totalorder %s23, 1
      %p116 = por %p114, %p115
      %p118 = scmp.ne.s32.totalorder %s101, %s117
      %p119 = scmp.eq.s32.totalorder %s23, 0
      %p120 = por %p118, %p119
      %p121 = scmp.le.s32.totalorder 1, %s17
      %p122 = scmp.lt.s32.totalorder %s17, 3
      %p123 = pnand %p121, %p122
      %p124 = pneg %p123
      // Predicated region
      $region9: #{tpu_custom_call.1} parent=5 // pred_check
        _
      $region10: #{tpu_custom_call.1} parent=5 // pred_check_branch
        %126 = sbr.rel (%p123) target = $region12
      $region11: #{tpu_custom_call.1} parent=5 // pred_region
        %s127 = ssub.s32 %s17, 1
      $region12: #{tpu_custom_call.1} parent=5 // pred_fallthru
        _
      %p128 = scmp.lt.s32.totalorder %s17, 2
      // Predicated region
      $region13: #{tpu_custom_call.1} parent=5 // pred_check
        %p129 = pneg %p128
      $region14: #{tpu_custom_call.1} parent=5 // pred_check_branch
        %131 = sbr.rel (%p129) target = $region16
      $region15: #{tpu_custom_call.1} parent=5 // pred_region
        // Predicated region
        $region17: #{tpu_custom_call.1} parent=15 // pred_check
          %p132 = pneg %p51
        $region18: #{tpu_custom_call.1} parent=15 // pred_check_branch
          %134 = sbr.rel (%p132) target = $region20
        $region19: #{tpu_custom_call.1} parent=15 // pred_region
          %s135 = sand.u32 %s41, 1
          %s136 = scalar_lea.sflag [#allocation3], %s135
          %s137 = sand.u32 %s41, 1
          %s138 = smul.addr %s137, 32
          %s139 = scalar_lea.vmem [#allocation2], %s138
          %s141 = ssub.s32 512, 512
          %142 = vsyncadd %s136, %s141
          %s143 = smul.addr %s24, 4
          %s144 = sadd.s32 %s25, %s143
          %s145 = smul.addr %s144, 128
          %s146 = scalar_lea.hbm %s0, %s145
          %s147 = sshll.u32 %s139, 4
          %s148 = int_to_ptr.vmem [resolvable:$true] %s147
          %153 = dma.hbm_to_vmem [thread:$0]  %s146, 512, %s148, %s136, 128, 128, 8
        $region20: #{tpu_custom_call.1} parent=15 // pred_fallthru
          _
        // Predicated region
        $region21: #{tpu_custom_call.1} parent=15 // pred_check
          %p154 = pneg %p79
        $region22: #{tpu_custom_call.1} parent=15 // pred_check_branch
          %156 = sbr.rel (%p154) target = $region24
        $region23: #{tpu_custom_call.1} parent=15 // pred_region
          %s157 = sand.u32 %s69, 1
          %s158 = scalar_lea.sflag [#allocation6], %s157
          %s159 = sand.u32 %s69, 1
          %s160 = smul.addr %s159, 32
          %s161 = scalar_lea.vmem [#allocation5], %s160
          %s163 = ssub.s32 512, 512
          %164 = vsyncadd %s158, %s163
          %s165 = smul.addr %s24, 4
          %s166 = sadd.s32 %s25, %s165
          %s167 = smul.addr %s166, 128
          %s168 = scalar_lea.hbm %s1, %s167
          %s169 = sshll.u32 %s161, 4
          %s170 = int_to_ptr.vmem [resolvable:$true] %s169
          %175 = dma.hbm_to_vmem [thread:$0]  %s168, 512, %s170, %s158, 128, 128, 8
        $region24: #{tpu_custom_call.1} parent=15 // pred_fallthru
          _
      $region16: #{tpu_custom_call.1} parent=5 // pred_fallthru
        _
      %p176 = scmp.le.s32.totalorder 1, %s17
      %p177 = scmp.lt.s32.totalorder %s17, 3
      %p178 = pnand %p176, %p177
      %p179 = pneg %p178
      // Predicated region
      $region25: #{tpu_custom_call.1} parent=5 // pred_check
        _
      $region26: #{tpu_custom_call.1} parent=5 // pred_check_branch
        %181 = sbr.rel (%p178) target = $region28
      $region27: #{tpu_custom_call.1} parent=5 // pred_region
        %s182 = ssub.s32 %s17, 1
        %s183 = sand.u32 %s44, 1
        %s184 = scalar_lea.sflag [#allocation3], %s183
        %s185 = sand.u32 %s44, 1
        %s186 = smul.addr %s185, 32
        %s187 = scalar_lea.vmem [#allocation2], %s186
        // Predicated region
        $region29: #{tpu_custom_call.1} parent=27 // pred_check
          %p188 = pneg %p57
        $region30: #{tpu_custom_call.1} parent=27 // pred_check_branch
          %190 = sbr.rel (%p188) target = $region32
        $region31: #{tpu_custom_call.1} parent=27 // pred_region
          %191 = dma.done %s184, 512
        $region32: #{tpu_custom_call.1} parent=27 // pred_fallthru
          _
        %s192 = sand.u32 %s72, 1
        %s193 = scalar_lea.sflag [#allocation6], %s192
        %s194 = sand.u32 %s72, 1
        %s195 = smul.addr %s194, 32
        %s196 = scalar_lea.vmem [#allocation5], %s195
        // Predicated region
        $region33: #{tpu_custom_call.1} parent=27 // pred_check
          %p197 = pneg %p85
        $region34: #{tpu_custom_call.1} parent=27 // pred_check_branch
          %199 = sbr.rel (%p197) target = $region36
        $region35: #{tpu_custom_call.1} parent=27 // pred_region
          %200 = dma.done %s193, 512
        $region36: #{tpu_custom_call.1} parent=27 // pred_fallthru
          _
        %s201 = sand.u32 %s44, 1
        %s202 = scalar_lea.sflag [#allocation3], %s201
        %s203 = sand.u32 %s44, 1
        %s204 = smul.addr %s203, 32
        %s205 = scalar_lea.vmem [#allocation2], %s204
        %p206 = pneg %p57
        %p207 = pneg %p54
        %s208 = sand.u32 %s72, 1
        %s209 = scalar_lea.sflag [#allocation6], %s208
        %s210 = sand.u32 %s72, 1
        %s211 = smul.addr %s210, 32
        %s212 = scalar_lea.vmem [#allocation5], %s211
        %p213 = pneg %p85
        %p214 = pneg %p82
        %p215 = pneg %p113
        %p216 = pneg %p110
        %s217 = sand.u32 %s100, 1
        %s218 = scalar_lea.sflag [#allocation4], %s217
        %s219 = sand.u32 %s100, 1
        %s220 = smul.addr %s219, 8
        %s221 = scalar_lea.vmem [#allocation7], %s220
        %v222 = vld [vmem:[%s187] sm:$0xff]
        %v223 = vxor.u32 %v222, 2147483648
        %v224 = vmul.f32 %v223, 1.442695
        %v225 = vpow.pop %v224
        %v226 = vadd.f32 %v225, 1.0
        %v227 = vrcp.pop %v226
        %v228 = vmul.f32 1.0, %v227
        %v229 = vld [vmem:[%s196] sm:$0xff]
        %v230 = vmul.f32 %v228, 1.442695
        %v231 = vpow.pop %v230
        %s232 = scalar_lea.vmem %s187, 8 [#allocation2]
        %v233 = vld [vmem:[%s232] sm:$0xff]
        %v234 = vxor.u32 %v233, 2147483648
        %v235 = vmul.f32 %v234, 1.442695
        %v236 = vpow.pop %v235
        %v237 = vadd.f32 %v236, 1.0
        %v238 = vrcp.pop %v237
        %v239 = vmul.f32 1.0, %v238
        %s240 = scalar_lea.vmem %s196, 8 [#allocation5]
        %v241 = vld [vmem:[%s240] sm:$0xff]
        %vm242 = vcmp.gt.f32.partialorder %v241, %v229
        %v243 = vsel %vm242, %v241, %v229
        %v244 = vsel %vm242, %v239, %v228
        %v245 = vmul.f32 %v239, 1.442695
        %v246 = vpow.pop %v245
        %v247 = vadd.f32 %v231, %v246
        %s248 = scalar_lea.vmem %s187, 16 [#allocation2]
        %v249 = vld [vmem:[%s248] sm:$0xff]
        %v250 = vxor.u32 %v249, 2147483648
        %v251 = vmul.f32 %v250, 1.442695
        %v252 = vpow.pop %v251
        %v253 = vadd.f32 %v252, 1.0
        %v254 = vrcp.pop %v253
        %v255 = vmul.f32 1.0, %v254
        %s256 = scalar_lea.vmem %s196, 16 [#allocation5]
        %v257 = vld [vmem:[%s256] sm:$0xff]
        %vm258 = vcmp.gt.f32.partialorder %v257, %v243
        %v259 = vsel %vm258, %v257, %v243
        %v260 = vsel %vm258, %v255, %v244
        %v261 = vmul.f32 %v255, 1.442695
        %v262 = vpow.pop %v261
        %v263 = vadd.f32 %v247, %v262
        %s264 = scalar_lea.vmem %s187, 24 [#allocation2]
        %v265 = vld [vmem:[%s264] sm:$0xff]
        %v266 = vxor.u32 %v265, 2147483648
        %v267 = vmul.f32 %v266, 1.442695
        %v268 = vpow.pop %v267
        %v269 = vadd.f32 %v268, 1.0
        %v270 = vrcp.pop %v269
        %v271 = vmul.f32 1.0, %v270
        %s272 = scalar_lea.vmem %s196, 24 [#allocation5]
        %v273 = vld [vmem:[%s272] sm:$0xff]
        %vm274 = vcmp.gt.f32.partialorder %v273, %v259
        %v275 = vsel %vm274, %v271, %v260
        %v276 = vmul.f32 %v271, 1.442695
        %v277 = vpow.pop %v276
        %v278 = vadd.f32 %v263, %v277
        %v279 = vlog2.pop %v278
        %v280 = vmul.f32 %v279, 0.6931472
        %v281 = vsub.f32 %v280, %v275
        %282 = vst [vmem:[%s221] sm:$0xff] %v281
        %s283 = sand.u32 %s100, 1
        %s284 = scalar_lea.sflag [#allocation4], %s283
        %s285 = sand.u32 %s100, 1
        %s286 = smul.addr %s285, 8
        %s287 = scalar_lea.vmem [#allocation7], %s286
        // Predicated region
        $region37: #{tpu_custom_call.1} parent=27 // pred_check
          %p288 = pneg %p110
        $region38: #{tpu_custom_call.1} parent=27 // pred_check_branch
          %290 = sbr.rel (%p288) target = $region40
        $region39: #{tpu_custom_call.1} parent=27 // pred_region
          %s292 = ssub.s32 128, 128
          %293 = vsyncadd %s284, %s292
          %s294 = sadd.s32 %s27, %s26
          %s295 = smul.addr %s294, 128
          %s296 = scalar_lea.hbm %s2, %s295
          %s298 = sshll.u32 %s287, 4
          %s299 = int_to_ptr.vmem [resolvable:$true] %s298
          %301 = dma.vmem_to_hbm [thread:$0]  %s299, 128, %s296, %s284
        $region40: #{tpu_custom_call.1} parent=27 // pred_fallthru
          _
      $region28: #{tpu_custom_call.1} parent=5 // pred_fallthru
        _
      %p302 = scmp.le.s32.totalorder 2, %s17
      // Predicated region
      $region41: #{tpu_custom_call.1} parent=5 // pred_check
        %p303 = pneg %p302
      $region42: #{tpu_custom_call.1} parent=5 // pred_check_branch
        %305 = sbr.rel (%p303) target = $region44
      $region43: #{tpu_custom_call.1} parent=5 // pred_region
        %s306 = ssub.s32 %s17, 2
        // Predicated region
        $region45: #{tpu_custom_call.1} parent=43 // pred_check
          %p307 = pneg %p116
        $region46: #{tpu_custom_call.1} parent=43 // pred_check_branch
          %309 = sbr.rel (%p307) target = $region48
        $region47: #{tpu_custom_call.1} parent=43 // pred_region
          %s310 = sand.u32 %s101, 1
          %s311 = scalar_lea.sflag [#allocation4], %s310
          %s312 = sand.u32 %s101, 1
          %s313 = smul.addr %s312, 8
          %s314 = scalar_lea.vmem [#allocation7], %s313
          %315 = dma.done %s311, 128
        $region48: #{tpu_custom_call.1} parent=43 // pred_fallthru
          _
      $region44: #{tpu_custom_call.1} parent=5 // pred_fallthru
        _
    $region6: #{tpu_custom_call.1} parent=1 // loop_footer
      %s21 = sadd.s32 1, %s17
    $region7: #{tpu_custom_call.1} parent=1 // loop_footer_branch
      %16 = sbr.rel target = $region3
    $region8: #{tpu_custom_call.1} parent=1 // loop_exit
      _
    %316 = vsyncpa [#allocation3], 1
    %s317 = scalar_lea.sflag [#allocation3], 1
    %318 = vsyncpa %s317, 1
    %319 = vsyncpa [#allocation6], 1
    %s320 = scalar_lea.sflag [#allocation6], 1
    %321 = vsyncpa %s320, 1
    %322 = vsyncpa [#allocation4], 1
    %s323 = scalar_lea.sflag [#allocation4], 1
    %324 = vsyncpa %s323, 1

</llo_original>
